<compile_context>
chip_gen: v5e
topology: v5e:2x2
jax: 0.10.0
libtpu: 0.0.40
codegen_flags: <defaults>
</compile_context>

<pallas_src>
import functools

import jax
import jax.numpy as jnp
from jax.experimental import pallas as pl
from jax.experimental.pallas import tpu as pltpu

# ---------------- reduced ConvNeXt config ----------------
DEPTHS = (1, 1, 2, 1)
DIMS = (32, 64, 128, 256)      # later stages lane-dense (>=128 channels)
NUM_FEATURES = 1000            # backbone classifier output (ImageNet classes)
NUM_CLASSES = 2


def _pick_vmem_limit():
    # Generation-aware scoped-VMEM limit: ~3/4 of physical, capped at 100 MiB
    # (≈96 MiB on v5e/v6e's 128 MiB, ≈48 MiB on v7x's 64 MiB).
    try:
        cap = int(pltpu.get_tpu_info().vmem_capacity_bytes)
    except Exception:
        cap = 64 * 1024 * 1024
    return min(cap * 3 // 4, 100 * 1024 * 1024)


_VMEM_LIMIT = _pick_vmem_limit()


# ---------------- in-kernel math helpers ----------------
def _gelu(x):
    # tanh-approx GELU: one EUP tanh + ~6 VPU ops per element.
    # TODO(synk): PyTorch nn.GELU() uses exact erf; tanh form differs by up to ~1e-3 per element.
    c = 0.7978845608028654  # sqrt(2/pi)
    return 0.5 * x * (1.0 + jnp.tanh(c * (x + 0.044715 * x * x * x)))


def _layernorm(x, g, b, eps):
    mu = jnp.mean(x, axis=-1, keepdims=True)
    var = jnp.mean(jnp.square(x - mu), axis=-1, keepdims=True)
    return (x - mu) * jax.lax.rsqrt(var + eps) * g + b


# ---------------- Pallas kernels ----------------
def _stem_kernel(xp_ref, w_ref, b_ref, g_ref, bt_ref, o_ref, *, eps):
    # patchified 4x4/s4 conv as bf16 matmul + bias, then LayerNorm2d — fused.
    h = jnp.dot(xp_ref[...].astype(jnp.bfloat16), w_ref[...],
                preferred_element_type=jnp.float32) + b_ref[...]
    o_ref[...] = _layernorm(h, g_ref[...], bt_ref[...], eps).astype(o_ref.dtype)


def _cnblock_kernel(x_ref, dww_ref, dwb_ref, g_ref, b_ref, w1_ref, b1_ref,
                    w2_ref, b2_ref, ls_ref, o_ref, xpad_ref, *, H, W, P,
                    imgs_per_block, eps):
    # Fully fused CNBlock on a (rows, C) view:
    #   depthwise 7x7 (pad 3) -> LayerNorm(C) -> Linear(C,4C)+GELU -> Linear(4C,C)
    #   -> layer_scale -> + residual.
    rows, C = x_ref.shape

    # ---- depthwise 7x7 conv (zero-padded VMEM scratch; roll-based horizontal taps) ----
    # Zero ONLY the pad regions (the middle is fully overwritten below).  Done every grid step
    # so the kernel stays correct when the batch grid is sharded across megacore TensorCores.
    zpad = jnp.zeros((P, C), jnp.float32)
    xpad_ref[pl.ds(0, P), :] = zpad
    xpad_ref[pl.ds(P + rows, P), :] = zpad
    xpad_ref[pl.ds(P, rows), :] = x_ref[...].astype(jnp.float32)

    # hoisted edge masks (one compare each, reused by every tap)
    r = jax.lax.broadcasted_iota(jnp.int32, (rows, 1), 0)
    j_idx = r % W
    col_mask = {}
    for dw in range(-3, 4):
        if dw == 0 or abs(dw) >= W:
            continue
        col_mask[dw] = (j_idx >= -dw) if dw < 0 else (j_idx < W - dw)
    row_mask = {}
    if imgs_per_block > 1:
        # only needed when several images share one block; otherwise the zero pads cover
        # vertical out-of-bounds taps entirely.
        i_idx = (r // W) % H
        for dh in range(-3, 4):
            if dh == 0 or abs(dh) >= H:
                continue
            row_mask[dh] = (i_idx >= -dh) if dh < 0 else (i_idx < H - dh)

    use_roll = (rows % 8 == 0)            # keep XLU rolls on sublane-aligned blocks only
    wall = dww_ref[...].astype(jnp.float32)            # (49, C)
    acc = jnp.zeros((rows, C), jnp.float32)
    for kh in range(7):
        dh = kh - 3
        if abs(dh) >= H:
            continue                                   # tap row entirely in the zero padding
        xs = xpad_ref[pl.ds(P + dh * W, rows), :]      # one load per kh (7 total)
        if dh in row_mask:
            xs = jnp.where(row_mask[dh], xs, 0.0)      # cross-image guard, applied once per kh
        for kw in range(7):
            dw = kw - 3
            if abs(dw) >= W:
                continue
            if dw == 0:
                v = xs
            elif use_roll:
                # horizontal shift on the XLU; the wrapped rows are exactly the col-masked ones.
                v = pltpu.roll(xs, (-dw) % rows, 0)
                v = jnp.where(col_mask[dw], v, 0.0)
            else:
                v = xpad_ref[pl.ds(P + dh * W + dw, rows), :]
                if dh in row_mask:
                    v = jnp.where(row_mask[dh], v, 0.0)
                v = jnp.where(col_mask[dw], v, 0.0)
            t = kh * 7 + kw
            acc = acc + v * wall[t:t + 1, :]
    h = acc + dwb_ref[...]

    # ---- LayerNorm over channels ----
    hn = _layernorm(h, g_ref[...], b_ref[...], eps)

    # ---- MLP: expand 4x + GELU, project back (bf16 MXU operands, f32 accumulation) ----
    # TODO(synk): for real ConvNeXt-L (C=1536) chunk the 4C hidden dim so w1/w2 fit v7x VMEM.
    h1 = jnp.dot(hn.astype(jnp.bfloat16), w1_ref[...],
                 preferred_element_type=jnp.float32) + b1_ref[...]
    h1 = _gelu(h1)
    y = jnp.dot(h1.astype(jnp.bfloat16), w2_ref[...],
                preferred_element_type=jnp.float32) + b2_ref[...]

    # ---- layer scale + residual (stochastic depth is identity in eval mode) ----
    o_ref[...] = (x_ref[...].astype(jnp.float32) + ls_ref[...] * y).astype(o_ref.dtype)


def _downsample_kernel(t0_ref, t1_ref, t2_ref, t3_ref, g_ref, b_ref,
                       w_ref, bias_ref, o_ref, *, eps):
    # Fused LayerNorm2d + Conv2d(k=2, s=2): LN each of the 4 taps, concatenate along channels and
    # do ONE (rows, 4*Cin) x (4*Cin, Cout) bf16 matmul (4x better MXU K-utilization).
    g = g_ref[...]
    b = b_ref[...]
    xn = jnp.concatenate(
        [_layernorm(t[...].astype(jnp.float32), g, b, eps)
         for t in (t0_ref, t1_ref, t2_ref, t3_ref)], axis=-1).astype(jnp.bfloat16)
    o_ref[...] = (jnp.dot(xn, w_ref[...], preferred_element_type=jnp.float32)
                  + bias_ref[...]).astype(o_ref.dtype)


def _tail_kernel(x_ref, bg_ref, bb_ref, bw_ref, bbias_ref,
                 hg_ref, hb_ref, hw_ref, hbias_ref, o_ref, *, eps_bb, eps_head):
    # AdaptiveAvgPool2d(1) + backbone LayerNorm2d + Linear(->1000)
    # + head LayerNorm(1000) + SiLU + Dropout1d(eval: identity) + Linear(1000 -> num_classes)
    x = x_ref[...].astype(jnp.float32)           # (N, H*W, C)
    pooled = jnp.mean(x, axis=1)                 # (N, C)
    pn = _layernorm(pooled, bg_ref[...], bb_ref[...], eps_bb)
    feats = jnp.dot(pn.astype(jnp.bfloat16), bw_ref[...],
                    preferred_element_type=jnp.float32) + bbias_ref[...]
    y = _layernorm(feats, hg_ref[...], hb_ref[...], eps_head)
    y = y * jax.nn.sigmoid(y)                    # SiLU
    # TODO(synk): nn.Dropout1d is identity in eval mode; training-mode channel dropout RNG not reproduced.
    o_ref[...] = (jnp.dot(y.astype(jnp.bfloat16), hw_ref[...],
                          preferred_element_type=jnp.float32)
                  + hbias_ref[...]).astype(o_ref.dtype)


# ---------------- pallas_call wrappers ----------------
def _vmem_call(kernel, out_shape, *args):
    # TODO(synk): at real ConvNeXt-L resolutions these ungridded kernels need row tiling.
    return pl.pallas_call(
        kernel,
        out_shape=out_shape,
        in_specs=[pl.BlockSpec(memory_space=pltpu.MemorySpace.VMEM)] * len(args),
        out_specs=pl.BlockSpec(memory_space=pltpu.MemorySpace.VMEM),
        compiler_params=pltpu.CompilerParams(vmem_limit_bytes=_VMEM_LIMIT),
    )(*args)


def _pick_row_tile(M, cap=1024):
    if M <= cap:
        return M
    for t in (1024, 512, 256, 128, 64, 8):
        if M % t == 0:
            return t
    return M


def stem(x_nhwc, p):
    # patchify (stride-4) in XLA, then fused conv-matmul + LayerNorm with a row-parallel grid.
    # TODO(synk): the stride-4 patchify could move into the kernel via the index_map.
    xp = _patchify(x_nhwc, 4)
    M, K = xp.shape
    C0 = p["stem_w"].shape[1]
    tile = _pick_row_tile(M)
    full2d = lambda a: pl.BlockSpec(a.shape, lambda i: (0, 0))
    return pl.pallas_call(
        functools.partial(_stem_kernel, eps=1e-6),
        grid=(M // tile,),
        out_shape=jax.ShapeDtypeStruct((M, C0), x_nhwc.dtype),
        in_specs=[pl.BlockSpec((tile, K), lambda i: (i, 0)),
                  full2d(p["stem_w"]), full2d(p["stem_b"]),
                  full2d(p["stem_ln_g"]), full2d(p["stem_ln_b"])],
        out_specs=pl.BlockSpec((tile, C0), lambda i: (i, 0)),
        compiler_params=pltpu.CompilerParams(
            dimension_semantics=("parallel",), vmem_limit_bytes=_VMEM_LIMIT),
    )(xp, p["stem_w"], p["stem_b"], p["stem_ln_g"], p["stem_ln_b"])


def cnblock(x2d, blk, N, H, W):
    M, C = x2d.shape
    rows_img = H * W
    # Batch-parallel grid (shards across v7x's 2 TensorCores) when blocks stay sublane-aligned.
    grid_n = N if (rows_img % 8 == 0 and N > 1) else 1
    rows_blk = M // grid_n
    imgs_per_block = N // grid_n
    P = (3 * W + 3 + 7) // 8 * 8                 # pad rounded up to a sublane multiple
    full2d = lambda a: pl.BlockSpec(a.shape, lambda n: (0, 0))
    args = (x2d, blk["dw_w"], blk["dw_b"], blk["ln_g"], blk["ln_b"],
            blk["w1"], blk["b1"], blk["w2"], blk["b2"], blk["ls"])
    in_specs = [pl.BlockSpec((rows_blk, C), lambda n: (n, 0))] + [full2d(a) for a in args[1:]]
    # TODO(synk): for real ConvNeXt-L image sizes also tile the row dimension with a
    # 3-spatial-row halo so per-step activations fit v7x's 64 MiB VMEM and pipeline better.
    return pl.pallas_call(
        functools.partial(_cnblock_kernel, H=H, W=W, P=P,
                          imgs_per_block=imgs_per_block, eps=1e-6),
        grid=(grid_n,),
        out_shape=jax.ShapeDtypeStruct((M, C), x2d.dtype),
        in_specs=in_specs,
        out_specs=pl.BlockSpec((rows_blk, C), lambda n: (n, 0)),
        scratch_shapes=[pltpu.VMEM((rows_blk + 2 * P, C), jnp.float32)],
        compiler_params=pltpu.CompilerParams(
            dimension_semantics=("parallel",), vmem_limit_bytes=_VMEM_LIMIT),
    )(*args)


def downsample(x2d, d, N, H, W):
    Cin = x2d.shape[1]
    Ho, Wo = H // 2, W // 2
    # TODO(synk): move the stride-2 tap extraction into the kernel to avoid this XLA relayout.
    x4 = x2d.reshape(N, H, W, Cin)
    taps = [x4[:, kh::2, kw::2, :].reshape(N * Ho * Wo, Cin)
            for kh in range(2) for kw in range(2)]
    cout = d["w"].shape[-1]
    out = jax.ShapeDtypeStruct((N * Ho * Wo, cout), x2d.dtype)
    return _vmem_call(functools.partial(_downsample_kernel, eps=1e-6), out,
                      *taps, d["ln_g"], d["ln_b"], d["w"], d["b"])


def tail(x2d, p, N):
    M, C = x2d.shape
    x3 = x2d.reshape(N, M // N, C)               # free layout reshape in XLA
    out = jax.ShapeDtypeStruct((N, NUM_CLASSES), x2d.dtype)
    return _vmem_call(functools.partial(_tail_kernel, eps_bb=1e-6, eps_head=1e-5), out,
                      x3, p["bb_ln_g"], p["bb_ln_b"], p["bb_fc_w"], p["bb_fc_b"],
                      p["head_ln_g"], p["head_ln_b"], p["head_fc_w"], p["head_fc_b"])


# ---------------- glue: patchify & conv-weight layout conversion ----------------
def _patchify(x_nhwc, s):
    # (N, H, W, C) -> (N*(H/s)*(W/s), s*s*C), flattened in (kh, kw, ci) order
    N, H, W, C = x_nhwc.shape
    x = x_nhwc.reshape(N, H // s, s, W // s, s, C)
    x = x.transpose(0, 1, 3, 2, 4, 5)
    return x.reshape(N * (H // s) * (W // s), s * s * C)


def _conv_w_to_mat(w_oihw):
    # PyTorch conv weight (Cout, Cin, kh, kw) -> (kh*kw*Cin, Cout), matching _patchify order
    co, ci, kh, kw = w_oihw.shape
    return jnp.transpose(w_oihw, (2, 3, 1, 0)).reshape(kh * kw * ci, co)


def _down_w_to_mat(w_oihw):
    # (Cout, Cin, 2, 2) -> (4*Cin, Cout), tap order (kh, kw) = (0,0),(0,1),(1,0),(1,1)
    return jnp.concatenate([jnp.transpose(w_oihw[:, :, kh, kw])
                            for kh in range(2) for kw in range(2)], axis=0)


# ---------------- deterministic parameter init ----------------
def _init_params(key):
    keys = iter(jax.random.split(key, 512))

    def nrm(shape, scale=0.02):
        return scale * jax.random.normal(next(keys), shape, dtype=jnp.float32)

    bf16 = jnp.bfloat16
    p = {}
    # stem: Conv2d(3, dims[0], k=4, s=4) + LayerNorm2d(eps=1e-6)
    p["stem_w"] = _conv_w_to_mat(nrm((DIMS[0], 3, 4, 4))).astype(bf16)
    p["stem_b"] = nrm((1, DIMS[0]))
    p["stem_ln_g"] = jnp.ones((1, DIMS[0]), jnp.float32)
    p["stem_ln_b"] = jnp.zeros((1, DIMS[0]), jnp.float32)

    # CNBlocks per stage
    p["blocks"] = []
    for depth, dim in zip(DEPTHS, DIMS):
        stage = []
        for _ in range(depth):
            dw = nrm((dim, 1, 7, 7))[:, 0]                               # (dim, 7, 7)
            stage.append(dict(
                dw_w=jnp.transpose(dw, (1, 2, 0)).reshape(49, dim),      # (49, C), f32 (VPU)
                dw_b=nrm((1, dim)),
                ln_g=jnp.ones((1, dim), jnp.float32),
                ln_b=jnp.zeros((1, dim), jnp.float32),
                w1=nrm((dim, 4 * dim)).astype(bf16),                     # MXU weights in bf16
                b1=nrm((1, 4 * dim)),
                w2=nrm((4 * dim, dim)).astype(bf16),
                b2=nrm((1, dim)),
                ls=jnp.full((1, dim), 1e-6, jnp.float32),                # layer_scale init (torchvision)
            ))
        p["blocks"].append(stage)

    # downsample layers: LayerNorm2d + Conv2d(k=2, s=2)
    p["down"] = []
    for i in range(3):
        cin, cout = DIMS[i], DIMS[i + 1]
        p["down"].append(dict(
            ln_g=jnp.ones((1, cin), jnp.float32),
            ln_b=jnp.zeros((1, cin), jnp.float32),
            w=_down_w_to_mat(nrm((cout, cin, 2, 2))).astype(bf16),       # (4*cin, cout)
            b=nrm((1, cout)),
        ))

    # backbone classifier: LayerNorm2d(dims[-1]) + Flatten + Linear(dims[-1], 1000)
    p["bb_ln_g"] = jnp.ones((1, DIMS[-1]), jnp.float32)
    p["bb_ln_b"] = jnp.zeros((1, DIMS[-1]), jnp.float32)
    p["bb_fc_w"] = nrm((DIMS[-1], NUM_FEATURES)).astype(bf16)
    p["bb_fc_b"] = nrm((1, NUM_FEATURES))

    # ConvNext module head: LayerNorm(1000), SiLU, Dropout1d, Linear(1000, num_classes)
    p["head_ln_g"] = jnp.ones((1, NUM_FEATURES), jnp.float32)
    p["head_ln_b"] = jnp.zeros((1, NUM_FEATURES), jnp.float32)
    p["head_fc_w"] = nrm((NUM_FEATURES, NUM_CLASSES)).astype(bf16)
    p["head_fc_b"] = nrm((1, NUM_CLASSES))
    return p


# ---------------- forward pass ----------------
def convnext_forward(params, x_nchw):
    x = jnp.transpose(x_nchw, (0, 2, 3, 1))        # NCHW -> NHWC
    N, H, W, _ = x.shape

    h = stem(x, params)                             # (N*(H/4)*(W/4), C0)
    H, W = H // 4, W // 4

    for si in range(4):
        if si > 0:
            h = downsample(h, params["down"][si - 1], N, H, W)
            H, W = H // 2, W // 2
        for blk in params["blocks"][si]:
            h = cnblock(h, blk, N, H, W)            # stays as a 2-D (N*H*W, C) view throughout

    return tail(h, params, N)                       # (N, NUM_CLASSES)


if __name__ == "__main__":
    key = jax.random.PRNGKey(0)
    pkey, xkey = jax.random.split(key)
    params = _init_params(pkey)
    x = jax.random.normal(xkey, (2, 3, 32, 32), dtype=jnp.float32)   # NCHW, like PyTorch
    logits = convnext_forward(params, x)
    jax.block_until_ready(logits)
    assert logits.shape == (2, NUM_CLASSES), logits.shape
    print("KERNEL_OK")
</pallas_src>

<mosaic_0001>
module attributes {stable_mosaic.version = 11 : i64} {
  func.func @_stem_kernel(%arg0: i32, %arg1: memref<128x48xf32, #tpu.memory_space<vmem>>, %arg2: memref<48x32xbf16, #tpu.memory_space<vmem>>, %arg3: memref<1x32xf32, #tpu.memory_space<vmem>>, %arg4: memref<1x32xf32, #tpu.memory_space<vmem>>, %arg5: memref<1x32xf32, #tpu.memory_space<vmem>>, %arg6: memref<128x32xf32, #tpu.memory_space<vmem>>) attributes {dimension_semantics = [#tpu.dimension_semantics<parallel>], iteration_bounds = array<i64: 1>, scalar_prefetch = 0 : i64, scratch_operands = 0 : i64, tpu.core_type = #tpu.core_type<tc>, window_params = [{transform_indices = @transform_0, window_bounds = array<i64: 128, 48>}, {pipeline_mode = #tpu.pipeline_mode<synchronous>, transform_indices = @transform_1, window_bounds = array<i64: 48, 32>}, {pipeline_mode = #tpu.pipeline_mode<synchronous>, transform_indices = @transform_2, window_bounds = array<i64: 1, 32>}, {pipeline_mode = #tpu.pipeline_mode<synchronous>, transform_indices = @transform_3, window_bounds = array<i64: 1, 32>}, {pipeline_mode = #tpu.pipeline_mode<synchronous>, transform_indices = @transform_4, window_bounds = array<i64: 1, 32>}, {transform_indices = @transform_5, window_bounds = array<i64: 128, 32>}]} {
    %c0 = arith.constant 0 : index
    %c0_0 = arith.constant 0 : index
    %0 = vector.load %arg1[%c0, %c0_0] : memref<128x48xf32, #tpu.memory_space<vmem>>, vector<128x48xf32>
    %1 = arith.truncf %0 : vector<128x48xf32> to vector<128x48xbf16>
    %c0_1 = arith.constant 0 : index
    %c0_2 = arith.constant 0 : index
    %2 = vector.load %arg2[%c0_1, %c0_2] : memref<48x32xbf16, #tpu.memory_space<vmem>>, vector<48x32xbf16>
    %cst = arith.constant dense<0.000000e+00> : vector<128x32xf32>
    %3 = tpu.matmul %1, %2, %cst {dimension_numbers = #tpu.dot_dimension_numbers<[1], [0], [0], [1], [0, 0, 1, 1], [], []>} : vector<128x48xbf16>, vector<48x32xbf16>, vector<128x32xf32> -> vector<128x32xf32>
    %c0_3 = arith.constant 0 : index
    %c0_4 = arith.constant 0 : index
    %4 = vector.load %arg3[%c0_3, %c0_4] : memref<1x32xf32, #tpu.memory_space<vmem>>, vector<1x32xf32>
    %5 = vector.broadcast %4 : vector<1x32xf32> to vector<128x32xf32>
    %6 = arith.addf %3, %5 : vector<128x32xf32>
    %c0_5 = arith.constant 0 : index
    %c0_6 = arith.constant 0 : index
    %7 = vector.load %arg4[%c0_5, %c0_6] : memref<1x32xf32, #tpu.memory_space<vmem>>, vector<1x32xf32>
    %c0_7 = arith.constant 0 : index
    %c0_8 = arith.constant 0 : index
    %8 = vector.load %arg5[%c0_7, %c0_8] : memref<1x32xf32, #tpu.memory_space<vmem>>, vector<1x32xf32>
    %cst_9 = arith.constant dense<0.000000e+00> : vector<128xf32>
    %9 = vector.multi_reduction <add>, %6, %cst_9 [1] : vector<128x32xf32> to vector<128xf32>
    %10 = vector.shape_cast %9 : vector<128xf32> to vector<128x1xf32>
    %cst_10 = arith.constant 3.200000e+01 : f32
    %11 = vector.broadcast %cst_10 : f32 to vector<128x1xf32>
    %12 = arith.divf %10, %11 : vector<128x1xf32>
    %13 = vector.broadcast %12 : vector<128x1xf32> to vector<128x32xf32>
    %14 = arith.subf %6, %13 : vector<128x32xf32>
    %15 = arith.mulf %14, %14 : vector<128x32xf32>
    %cst_11 = arith.constant dense<0.000000e+00> : vector<128xf32>
    %16 = vector.multi_reduction <add>, %15, %cst_11 [1] : vector<128x32xf32> to vector<128xf32>
    %17 = vector.shape_cast %16 : vector<128xf32> to vector<128x1xf32>
    %cst_12 = arith.constant 3.200000e+01 : f32
    %18 = vector.broadcast %cst_12 : f32 to vector<128x1xf32>
    %19 = arith.divf %17, %18 : vector<128x1xf32>
    %20 = vector.broadcast %12 : vector<128x1xf32> to vector<128x32xf32>
    %21 = arith.subf %6, %20 : vector<128x32xf32>
    %cst_13 = arith.constant 9.99999997E-7 : f32
    %22 = vector.broadcast %cst_13 : f32 to vector<128x1xf32>
    %23 = arith.addf %19, %22 : vector<128x1xf32>
    %24 = math.rsqrt %23 : vector<128x1xf32>
    %25 = vector.broadcast %24 : vector<128x1xf32> to vector<128x32xf32>
    %26 = arith.mulf %21, %25 : vector<128x32xf32>
    %27 = vector.broadcast %7 : vector<1x32xf32> to vector<128x32xf32>
    %28 = arith.mulf %26, %27 : vector<128x32xf32>
    %29 = vector.broadcast %8 : vector<1x32xf32> to vector<128x32xf32>
    %30 = arith.addf %28, %29 : vector<128x32xf32>
    %c0_14 = arith.constant 0 : index
    %c0_15 = arith.constant 0 : index
    %31 = vector.load %arg6[%c0_14, %c0_15] : memref<128x32xf32, #tpu.memory_space<vmem>>, vector<128x32xf32>
    tpu.vector_store %arg6[%c0_14, %c0_15], %30 {strides = array<i32>} : memref<128x32xf32, #tpu.memory_space<vmem>>, vector<128x32xf32>,
    return
  }
  func.func @transform_0(%arg0: i32) -> (i32, i32) {
    %c0_i32 = arith.constant 0 : i32
    %c0_i32_0 = arith.constant 0 : i32
    return %arg0, %c0_i32 : i32, i32
  }
  func.func @transform_1(%arg0: i32) -> (i32, i32) {
    %c0_i32 = arith.constant 0 : i32
    %c0_i32_0 = arith.constant 0 : i32
    %c0_i32_1 = arith.constant 0 : i32
    return %c0_i32, %c0_i32_0 : i32, i32
  }
  func.func @transform_2(%arg0: i32) -> (i32, i32) {
    %c0_i32 = arith.constant 0 : i32
    %c0_i32_0 = arith.constant 0 : i32
    %c0_i32_1 = arith.constant 0 : i32
    return %c0_i32, %c0_i32_0 : i32, i32
  }
  func.func @transform_3(%arg0: i32) -> (i32, i32) {
    %c0_i32 = arith.constant 0 : i32
    %c0_i32_0 = arith.constant 0 : i32
    %c0_i32_1 = arith.constant 0 : i32
    return %c0_i32, %c0_i32_0 : i32, i32
  }
  func.func @transform_4(%arg0: i32) -> (i32, i32) {
    %c0_i32 = arith.constant 0 : i32
    %c0_i32_0 = arith.constant 0 : i32
    %c0_i32_1 = arith.constant 0 : i32
    return %c0_i32, %c0_i32_0 : i32, i32
  }
  func.func @transform_5(%arg0: i32) -> (i32, i32) {
    %c0_i32 = arith.constant 0 : i32
    %c0_i32_0 = arith.constant 0 : i32
    return %arg0, %c0_i32 : i32, i32
  }
}

</mosaic_0001>

<llo_original>
// kernel: tpu_custom_call.1
$region0: #{tpu_custom_call.1}
  #allocation0 [shape = 'u32[]', space=smem, size = 0x4, offset = 0x4, fixed_abs, tag = 'smem constant byte address 0x4 - core index']
  #allocation1 [shape = 'u32[72,128]{1,0:T(1,128)}', space=vmem, size = 0x9000, scoped, tag = 'internal scratch']
  %s0 = inlined_call_operand.vmem [shape: f32[128,48], index: 0, kind: input, shape index: {}]
  %s1 = inlined_call_operand.vmem [shape: bf16[48,32], index: 1, kind: input, shape index: {}]
  %s2 = inlined_call_operand.vmem [shape: f32[1,32], index: 2, kind: input, shape index: {}]
  %s3 = inlined_call_operand.vmem [shape: f32[1,32], index: 3, kind: input, shape index: {}]
  %s4 = inlined_call_operand.vmem [shape: f32[1,32], index: 4, kind: input, shape index: {}]
  %s5 = inlined_call_operand.vmem [shape: f32[128,32], index: 5, kind: output, shape index: {}]
  %s6 = sld [smem:[#allocation0]]
  $region30: #{tpu_custom_call.1} parent=0
    _
  %s8 = ssub.s32 1, %s6
  %s9 = scalar_select 0, %s8, %s6
  // Predicated region
  $region2: #{tpu_custom_call.1} parent=0 // pred_check
    _
  $region3: #{tpu_custom_call.1} parent=0 // pred_check_branch
    %11 = sbr.rel (0) target = $region5
  $region4: #{tpu_custom_call.1} parent=0 // pred_region
    _
  $region5: #{tpu_custom_call.1} parent=0 // pred_fallthru
    _
  // Predicated region
  $region6: #{tpu_custom_call.1} parent=0 // pred_check
    _
  $region7: #{tpu_custom_call.1} parent=0 // pred_check_branch
    %13 = sbr.rel (0) target = $region9
  $region8: #{tpu_custom_call.1} parent=0 // pred_region
    _
  $region9: #{tpu_custom_call.1} parent=0 // pred_fallthru
    _
  // Predicated region
  $region10: #{tpu_custom_call.1} parent=0 // pred_check
    _
  $region11: #{tpu_custom_call.1} parent=0 // pred_check_branch
    %15 = sbr.rel (0) target = $region13
  $region12: #{tpu_custom_call.1} parent=0 // pred_region
    _
  $region13: #{tpu_custom_call.1} parent=0 // pred_fallthru
    _
  // Predicated region
  $region14: #{tpu_custom_call.1} parent=0 // pred_check
    _
  $region15: #{tpu_custom_call.1} parent=0 // pred_check_branch
    %17 = sbr.rel (0) target = $region17
  $region16: #{tpu_custom_call.1} parent=0 // pred_region
    _
  $region17: #{tpu_custom_call.1} parent=0 // pred_fallthru
    _
  // Predicated region
  $region18: #{tpu_custom_call.1} parent=0 // pred_check
    _
  $region19: #{tpu_custom_call.1} parent=0 // pred_check_branch
    %19 = sbr.rel (0) target = $region21
  $region20: #{tpu_custom_call.1} parent=0 // pred_region
    _
  $region21: #{tpu_custom_call.1} parent=0 // pred_fallthru
    _
  %v21 = vld [vmem:[%s0] sm:$0xff]
  %v22 = vld [vmem:[%s0 + $0x8] sm:$0xff]
  %v23 = vld [vmem:[%s0 + $0x10] sm:$0xff]
  %v24 = vld [vmem:[%s0 + $0x18] sm:$0xff]
  %v25 = vld [vmem:[%s0 + $0x20] sm:$0xff]
  %v26 = vld [vmem:[%s0 + $0x28] sm:$0xff]
  %v27 = vld [vmem:[%s0 + $0x30] sm:$0xff]
  %v28 = vld [vmem:[%s0 + $0x38] sm:$0xff]
  %v29 = vld [vmem:[%s0 + $0x40] sm:$0xff]
  %v30 = vld [vmem:[%s0 + $0x48] sm:$0xff]
  %v31 = vld [vmem:[%s0 + $0x50] sm:$0xff]
  %v32 = vld [vmem:[%s0 + $0x58] sm:$0xff]
  %v33 = vld [vmem:[%s0 + $0x60] sm:$0xff]
  %v34 = vld [vmem:[%s0 + $0x68] sm:$0xff]
  %v35 = vld [vmem:[%s0 + $0x70] sm:$0xff]
  %v36 = vld [vmem:[%s0 + $0x78] sm:$0xff]
  %v37 = vpack.c.bf16 %v22, %v21
  %v38 = vpack.c.bf16 %v24, %v23
  %v39 = vpack.c.bf16 %v26, %v25
  %v40 = vpack.c.bf16 %v28, %v27
  %v41 = vpack.c.bf16 %v30, %v29
  %v42 = vpack.c.bf16 %v32, %v31
  %v43 = vpack.c.bf16 %v34, %v33
  %v44 = vpack.c.bf16 %v36, %v35
  %v45 = vld [vmem:[%s1] sm:$0xf]
  %v46 = vld [vmem:[%s1 + $0x4] sm:$0xf]
  %v47 = vld [vmem:[%s1 + $0x8] sm:$0xf]
  %v48 = vld [vmem:[%s1 + $0xc] sm:$0xf]
  %v49 = vld [vmem:[%s1 + $0x10] sm:$0xf]
  %v50 = vld [vmem:[%s1 + $0x14] sm:$0xf]
  %v51 = vld [vmem:[%s2] sm:$0x1]
  %v53 = vperm.slane %v51, 0
  %v61 = vunpack.c.l.b16 %v45
  %v62 = vunpack.c.l.b16 %v46
  %v63 = vunpack.c.l.b16 %v47
  %v64 = vunpack.c.l.b16 %v48
  %v65 = vunpack.c.l.b16 %v49
  %v66 = vunpack.c.l.b16 %v50
  %v67 = vpack.c.b16 %v62, %v61
  %v68 = vpack.c.b16 %v64, %v63
  %v69 = vpack.c.b16 %v66, %v65
  %vm73 = vcmask 392192
  %v75 = vsel %vm73, %v37, 0
  %v78 = vsel %vm73, %v38, 0
  %v81 = vsel %vm73, %v39, 0
  %v84 = vsel %vm73, %v40, 0
  %v87 = vsel %vm73, %v41, 0
  %v90 = vsel %vm73, %v42, 0
  %v93 = vsel %vm73, %v43, 0
  %v96 = vsel %vm73, %v44, 0
  %98 = vmatpush.bf16.msra.mxu0 0
  %99 = vmatpush.bf16.msra.mxu0 0
  %100 = vmatpush.bf16.msra.mxu0 0
  %101 = vmatpush.bf16.msra.mxu0 0
  %102 = vmatpush.bf16.msra.mxu0 0
  %103 = vmatpush.bf16.msra.mxu0 %v69
  %104 = vmatpush.bf16.msra.mxu0 %v68
  %105 = vmatpush.bf16.msra.mxu0 %v67
  %106 = vmatmul.bf16.gmra.mxu0 %v75
  %v107 = vpop.f32.mrf.mxu0
  %v108 = vadd.f32 %v53, %v107
  %v109 = vpop.f32.mrf.mxu0
  %v110 = vadd.f32 %v53, %v109
  %111 = vmatmul.bf16.gmra.mxu0 %v78
  %v112 = vpop.f32.mrf.mxu0
  %v113 = vadd.f32 %v53, %v112
  %v114 = vpop.f32.mrf.mxu0
  %v115 = vadd.f32 %v53, %v114
  %116 = vmatmul.bf16.gmra.mxu0 %v81
  %v117 = vpop.f32.mrf.mxu0
  %v118 = vadd.f32 %v53, %v117
  %v119 = vpop.f32.mrf.mxu0
  %v120 = vadd.f32 %v53, %v119
  %121 = vmatmul.bf16.gmra.mxu0 %v84
  %v122 = vpop.f32.mrf.mxu0
  %v123 = vadd.f32 %v53, %v122
  %v124 = vpop.f32.mrf.mxu0
  %v125 = vadd.f32 %v53, %v124
  %126 = vmatmul.bf16.gmra.mxu0 %v87
  %v127 = vpop.f32.mrf.mxu0
  %v128 = vadd.f32 %v53, %v127
  %v129 = vpop.f32.mrf.mxu0
  %v130 = vadd.f32 %v53, %v129
  %131 = vmatmul.bf16.gmra.mxu0 %v90
  %v132 = vpop.f32.mrf.mxu0
  %v133 = vadd.f32 %v53, %v132
  %v134 = vpop.f32.mrf.mxu0
  %v135 = vadd.f32 %v53, %v134
  %136 = vmatmul.bf16.gmra.mxu0 %v93
  %v137 = vpop.f32.mrf.mxu0
  %v138 = vadd.f32 %v53, %v137
  %v139 = vpop.f32.mrf.mxu0
  %v140 = vadd.f32 %v53, %v139
  %141 = vmatmul.bf16.gmra.mxu0 %v96
  %v142 = vpop.f32.mrf.mxu0
  %v143 = vadd.f32 %v53, %v142
  %v144 = vpop.f32.mrf.mxu0
  %v145 = vadd.f32 %v53, %v144
  %146 = vdwg.mxu0
  %v147 = vld [vmem:[%s3] sm:$0x1]
  %v148 = vld [vmem:[%s4] sm:$0x1]
  %vm149 = vcmask 261120
  %v150 = vsel %vm149, %v108, 0.0
  %151 = vadd.xlane.f32.xlu0 %v150
  %v152 = vpop.xlane.xlu0 %151
  %v153 = vsel %vm149, %v110, 0.0
  %154 = vadd.xlane.f32.xlu0 %v153
  %v155 = vpop.xlane.xlu0 %154
  %v156 = vsel %vm149, %v113, 0.0
  %157 = vadd.xlane.f32.xlu0 %v156
  %v158 = vpop.xlane.xlu0 %157
  %v159 = vsel %vm149, %v115, 0.0
  %160 = vadd.xlane.f32.xlu0 %v159
  %v161 = vpop.xlane.xlu0 %160
  %v162 = vsel %vm149, %v118, 0.0
  %163 = vadd.xlane.f32.xlu0 %v162
  %v164 = vpop.xlane.xlu0 %163
  %v165 = vsel %vm149, %v120, 0.0
  %166 = vadd.xlane.f32.xlu0 %v165
  %v167 = vpop.xlane.xlu0 %166
  %v168 = vsel %vm149, %v123, 0.0
  %169 = vadd.xlane.f32.xlu0 %v168
  %v170 = vpop.xlane.xlu0 %169
  %v171 = vsel %vm149, %v125, 0.0
  %172 = vadd.xlane.f32.xlu0 %v171
  %v173 = vpop.xlane.xlu0 %172
  %v174 = vsel %vm149, %v128, 0.0
  %175 = vadd.xlane.f32.xlu0 %v174
  %v176 = vpop.xlane.xlu0 %175
  %v177 = vsel %vm149, %v130, 0.0
  %178 = vadd.xlane.f32.xlu0 %v177
  %v179 = vpop.xlane.xlu0 %178
  %v180 = vsel %vm149, %v133, 0.0
  %181 = vadd.xlane.f32.xlu0 %v180
  %v182 = vpop.xlane.xlu0 %181
  %v183 = vsel %vm149, %v135, 0.0
  %184 = vadd.xlane.f32.xlu0 %v183
  %v185 = vpop.xlane.xlu0 %184
  %v186 = vsel %vm149, %v138, 0.0
  %187 = vadd.xlane.f32.xlu0 %v186
  %v188 = vpop.xlane.xlu0 %187
  %v189 = vsel %vm149, %v140, 0.0
  %190 = vadd.xlane.f32.xlu0 %v189
  %v191 = vpop.xlane.xlu0 %190
  %v192 = vsel %vm149, %v143, 0.0
  %193 = vadd.xlane.f32.xlu0 %v192
  %v194 = vpop.xlane.xlu0 %193
  %v195 = vsel %vm149, %v145, 0.0
  %196 = vadd.xlane.f32.xlu0 %v195
  %v197 = vpop.xlane.xlu0 %196
  %v198 = vrcp.pop 32.0
  %v199 = vmul.f32 32.0, %v198
  %v200 = vsub.f32 1.0, %v199
  %v201 = vmul.f32 %v198, %v200
  %v202 = vadd.f32 %v198, %v201
  %vm203 = vweird.f32 %v198
  %v204 = vsel %vm203, %v198, %v202
  %v205 = vmul.f32 %v152, %v204
  %v206 = vmul.f32 %v155, %v204
  %v207 = vmul.f32 %v158, %v204
  %v208 = vmul.f32 %v161, %v204
  %v209 = vmul.f32 %v164, %v204
  %v210 = vmul.f32 %v167, %v204
  %v211 = vmul.f32 %v170, %v204
  %v212 = vmul.f32 %v173, %v204
  %v213 = vmul.f32 %v176, %v204
  %v214 = vmul.f32 %v179, %v204
  %v215 = vmul.f32 %v182, %v204
  %v216 = vmul.f32 %v185, %v204
  %v217 = vmul.f32 %v188, %v204
  %v218 = vmul.f32 %v191, %v204
  %v219 = vmul.f32 %v194, %v204
  %v220 = vmul.f32 %v197, %v204
  %v221 = vsub.f32 %v108, %v205
  %v222 = vsub.f32 %v110, %v206
  %v223 = vsub.f32 %v113, %v207
  %v224 = vsub.f32 %v115, %v208
  %v225 = vsub.f32 %v118, %v209
  %v226 = vsub.f32 %v120, %v210
  %v227 = vsub.f32 %v123, %v211
  %v228 = vsub.f32 %v125, %v212
  %v229 = vsub.f32 %v128, %v213
  %v230 = vsub.f32 %v130, %v214
  %v231 = vsub.f32 %v133, %v215
  %v232 = vsub.f32 %v135, %v216
  %v233 = vsub.f32 %v138, %v217
  %v234 = vsub.f32 %v140, %v218
  %v235 = vsub.f32 %v143, %v219
  %v236 = vsub.f32 %v145, %v220
  %v237 = vmul.f32 %v221, %v221
  %v238 = vmul.f32 %v222, %v222
  %v239 = vmul.f32 %v223, %v223
  %v240 = vmul.f32 %v224, %v224
  %v241 = vmul.f32 %v225, %v225
  %v242 = vmul.f32 %v226, %v226
  %v243 = vmul.f32 %v227, %v227
  %v244 = vmul.f32 %v228, %v228
  %v245 = vmul.f32 %v229, %v229
  %v246 = vmul.f32 %v230, %v230
  %v247 = vmul.f32 %v231, %v231
  %v248 = vmul.f32 %v232, %v232
  %v249 = vmul.f32 %v233, %v233
  %v250 = vmul.f32 %v234, %v234
  %v251 = vmul.f32 %v235, %v235
  %v252 = vmul.f32 %v236, %v236
  %v253 = vsel %vm149, %v237, 0.0
  %254 = vadd.xlane.f32.xlu0 %v253
  %v255 = vpop.xlane.xlu0 %254
  %v256 = vsel %vm149, %v238, 0.0
  %257 = vadd.xlane.f32.xlu0 %v256
  %v258 = vpop.xlane.xlu0 %257
  %v259 = vsel %vm149, %v239, 0.0
  %260 = vadd.xlane.f32.xlu0 %v259
  %v261 = vpop.xlane.xlu0 %260
  %v262 = vsel %vm149, %v240, 0.0
  %263 = vadd.xlane.f32.xlu0 %v262
  %v264 = vpop.xlane.xlu0 %263
  %v265 = vsel %vm149, %v241, 0.0
  %266 = vadd.xlane.f32.xlu0 %v265
  %v267 = vpop.xlane.xlu0 %266
  %v268 = vsel %vm149, %v242, 0.0
  %269 = vadd.xlane.f32.xlu0 %v268
  %v270 = vpop.xlane.xlu0 %269
  %v271 = vsel %vm149, %v243, 0.0
  %272 = vadd.xlane.f32.xlu0 %v271
  %v273 = vpop.xlane.xlu0 %272
  %v274 = vsel %vm149, %v244, 0.0
  %275 = vadd.xlane.f32.xlu0 %v274
  %v276 = vpop.xlane.xlu0 %275
  %v277 = vsel %vm149, %v245, 0.0
  %278 = vadd.xlane.f32.xlu0 %v277
  %v279 = vpop.xlane.xlu0 %278
  %v280 = vsel %vm149, %v246, 0.0
  %281 = vadd.xlane.f32.xlu0 %v280
  %v282 = vpop.xlane.xlu0 %281
  %v283 = vsel %vm149, %v247, 0.0
  %284 = vadd.xlane.f32.xlu0 %v283
  %v285 = vpop.xlane.xlu0 %284
  %v286 = vsel %vm149, %v248, 0.0
  %287 = vadd.xlane.f32.xlu0 %v286
  %v288 = vpop.xlane.xlu0 %287
  %v289 = vsel %vm149, %v249, 0.0
  %290 = vadd.xlane.f32.xlu0 %v289
  %v291 = vpop.xlane.xlu0 %290
  %v292 = vsel %vm149, %v250, 0.0
  %293 = vadd.xlane.f32.xlu0 %v292
  %v294 = vpop.xlane.xlu0 %293
  %v295 = vsel %vm149, %v251, 0.0
  %296 = vadd.xlane.f32.xlu0 %v295
  %v297 = vpop.xlane.xlu0 %296
  %v298 = vsel %vm149, %v252, 0.0
  %299 = vadd.xlane.f32.xlu0 %v298
  %v300 = vpop.xlane.xlu0 %299
  %v301 = vmul.f32 %v255, %v204
  %v302 = vmul.f32 %v258, %v204
  %v303 = vmul.f32 %v261, %v204
  %v304 = vmul.f32 %v264, %v204
  %v305 = vmul.f32 %v267, %v204
  %v306 = vmul.f32 %v270, %v204
  %v307 = vmul.f32 %v273, %v204
  %v308 = vmul.f32 %v276, %v204
  %v309 = vmul.f32 %v279, %v204
  %v310 = vmul.f32 %v282, %v204
  %v311 = vmul.f32 %v285, %v204
  %v312 = vmul.f32 %v288, %v204
  %v313 = vmul.f32 %v291, %v204
  %v314 = vmul.f32 %v294, %v204
  %v315 = vmul.f32 %v297, %v204
  %v316 = vmul.f32 %v300, %v204
  %v317 = vadd.f32 %v301, 1e-06
  %v318 = vadd.f32 %v302, 1e-06
  %v319 = vadd.f32 %v303, 1e-06
  %v320 = vadd.f32 %v304, 1e-06
  %v321 = vadd.f32 %v305, 1e-06
  %v322 = vadd.f32 %v306, 1e-06
  %v323 = vadd.f32 %v307, 1e-06
  %v324 = vadd.f32 %v308, 1e-06
  %v325 = vadd.f32 %v309, 1e-06
  %v326 = vadd.f32 %v310, 1e-06
  %v327 = vadd.f32 %v311, 1e-06
  %v328 = vadd.f32 %v312, 1e-06
  %v329 = vadd.f32 %v313, 1e-06
  %v330 = vadd.f32 %v314, 1e-06
  %v331 = vadd.f32 %v315, 1e-06
  %v332 = vadd.f32 %v316, 1e-06
  %v333 = vrsqrt.pop %v317
  %v334 = vmul.f32 %v333, %v317
  %v335 = vmul.f32 %v334, %v333
  %v336 = vmul.f32 0.5, %v335
  %v337 = vsub.f32 1.5, %v336
  %v338 = vmul.f32 %v333, %v337
  %vm339 = vweird.f32 %v317
  %vm340 = vweird.f32 %v333
  %vm341 = vmor %vm339, %vm340
  %v342 = vsel %vm341, %v333, %v338
  %v343 = vrsqrt.pop %v318
  %v344 = vmul.f32 %v343, %v318
  %v345 = vmul.f32 %v344, %v343
  %v346 = vmul.f32 0.5, %v345
  %v347 = vsub.f32 1.5, %v346
  %v348 = vmul.f32 %v343, %v347
  %vm349 = vweird.f32 %v318
  %vm350 = vweird.f32 %v343
  %vm351 = vmor %vm349, %vm350
  %v352 = vsel %vm351, %v343, %v348
  %v353 = vrsqrt.pop %v319
  %v354 = vmul.f32 %v353, %v319
  %v355 = vmul.f32 %v354, %v353
  %v356 = vmul.f32 0.5, %v355
  %v357 = vsub.f32 1.5, %v356
  %v358 = vmul.f32 %v353, %v357
  %vm359 = vweird.f32 %v319
  %vm360 = vweird.f32 %v353
  %vm361 = vmor %vm359, %vm360
  %v362 = vsel %vm361, %v353, %v358
  %v363 = vrsqrt.pop %v320
  %v364 = vmul.f32 %v363, %v320
  %v365 = vmul.f32 %v364, %v363
  %v366 = vmul.f32 0.5, %v365
  %v367 = vsub.f32 1.5, %v366
  %v368 = vmul.f32 %v363, %v367
  %vm369 = vweird.f32 %v320
  %vm370 = vweird.f32 %v363
  %vm371 = vmor %vm369, %vm370
  %v372 = vsel %vm371, %v363, %v368
  %v373 = vrsqrt.pop %v321
  %v374 = vmul.f32 %v373, %v321
  %v375 = vmul.f32 %v374, %v373
  %v376 = vmul.f32 0.5, %v375
  %v377 = vsub.f32 1.5, %v376
  %v378 = vmul.f32 %v373, %v377
  %vm379 = vweird.f32 %v321
  %vm380 = vweird.f32 %v373
  %vm381 = vmor %vm379, %vm380
  %v382 = vsel %vm381, %v373, %v378
  %v383 = vrsqrt.pop %v322
  %v384 = vmul.f32 %v383, %v322
  %v385 = vmul.f32 %v384, %v383
  %v386 = vmul.f32 0.5, %v385
  %v387 = vsub.f32 1.5, %v386
  %v388 = vmul.f32 %v383, %v387
  %vm389 = vweird.f32 %v322
  %vm390 = vweird.f32 %v383
  %vm391 = vmor %vm389, %vm390
  %v392 = vsel %vm391, %v383, %v388
  %v393 = vrsqrt.pop %v323
  %v394 = vmul.f32 %v393, %v323
  %v395 = vmul.f32 %v394, %v393
  %v396 = vmul.f32 0.5, %v395
  %v397 = vsub.f32 1.5, %v396
  %v398 = vmul.f32 %v393, %v397
  %vm399 = vweird.f32 %v323
  %vm400 = vweird.f32 %v393
  %vm401 = vmor %vm399, %vm400
  %v402 = vsel %vm401, %v393, %v398
  %v403 = vrsqrt.pop %v324
  %v404 = vmul.f32 %v403, %v324
  %v405 = vmul.f32 %v404, %v403
  %v406 = vmul.f32 0.5, %v405
  %v407 = vsub.f32 1.5, %v406
  %v408 = vmul.f32 %v403, %v407
  %vm409 = vweird.f32 %v324
  %vm410 = vweird.f32 %v403
  %vm411 = vmor %vm409, %vm410
  %v412 = vsel %vm411, %v403, %v408
  %v413 = vrsqrt.pop %v325
  %v414 = vmul.f32 %v413, %v325
  %v415 = vmul.f32 %v414, %v413
  %v416 = vmul.f32 0.5, %v415
  %v417 = vsub.f32 1.5, %v416
  %v418 = vmul.f32 %v413, %v417
  %vm419 = vweird.f32 %v325
  %vm420 = vweird.f32 %v413
  %vm421 = vmor %vm419, %vm420
  %v422 = vsel %vm421, %v413, %v418
  %v423 = vrsqrt.pop %v326
  %v424 = vmul.f32 %v423, %v326
  %v425 = vmul.f32 %v424, %v423
  %v426 = vmul.f32 0.5, %v425
  %v427 = vsub.f32 1.5, %v426
  %v428 = vmul.f32 %v423, %v427
  %vm429 = vweird.f32 %v326
  %vm430 = vweird.f32 %v423
  %vm431 = vmor %vm429, %vm430
  %v432 = vsel %vm431, %v423, %v428
  %v433 = vrsqrt.pop %v327
  %v434 = vmul.f32 %v433, %v327
  %v435 = vmul.f32 %v434, %v433
  %v436 = vmul.f32 0.5, %v435
  %v437 = vsub.f32 1.5, %v436
  %v438 = vmul.f32 %v433, %v437
  %vm439 = vweird.f32 %v327
  %vm440 = vweird.f32 %v433
  %vm441 = vmor %vm439, %vm440
  %v442 = vsel %vm441, %v433, %v438
  %v443 = vrsqrt.pop %v328
  %v444 = vmul.f32 %v443, %v328
  %v445 = vmul.f32 %v444, %v443
  %v446 = vmul.f32 0.5, %v445
  %v447 = vsub.f32 1.5, %v446
  %v448 = vmul.f32 %v443, %v447
  %vm449 = vweird.f32 %v328
  %vm450 = vweird.f32 %v443
  %vm451 = vmor %vm449, %vm450
  %v452 = vsel %vm451, %v443, %v448
  %v453 = vrsqrt.pop %v329
  %v454 = vmul.f32 %v453, %v329
  %v455 = vmul.f32 %v454, %v453
  %v456 = vmul.f32 0.5, %v455
  %v457 = vsub.f32 1.5, %v456
  %v458 = vmul.f32 %v453, %v457
  %vm459 = vweird.f32 %v329
  %vm460 = vweird.f32 %v453
  %vm461 = vmor %vm459, %vm460
  %v462 = vsel %vm461, %v453, %v458
  %v463 = vrsqrt.pop %v330
  %v464 = vmul.f32 %v463, %v330
  %v465 = vmul.f32 %v464, %v463
  %v466 = vmul.f32 0.5, %v465
  %v467 = vsub.f32 1.5, %v466
  %v468 = vmul.f32 %v463, %v467
  %vm469 = vweird.f32 %v330
  %vm470 = vweird.f32 %v463
  %vm471 = vmor %vm469, %vm470
  %v472 = vsel %vm471, %v463, %v468
  %v473 = vrsqrt.pop %v331
  %v474 = vmul.f32 %v473, %v331
  %v475 = vmul.f32 %v474, %v473
  %v476 = vmul.f32 0.5, %v475
  %v477 = vsub.f32 1.5, %v476
  %v478 = vmul.f32 %v473, %v477
  %vm479 = vweird.f32 %v331
  %vm480 = vweird.f32 %v473
  %vm481 = vmor %vm479, %vm480
  %v482 = vsel %vm481, %v473, %v478
  %v483 = vrsqrt.pop %v332
  %v484 = vmul.f32 %v483, %v332
  %v485 = vmul.f32 %v484, %v483
  %v486 = vmul.f32 0.5, %v485
  %v487 = vsub.f32 1.5, %v486
  %v488 = vmul.f32 %v483, %v487
  %vm489 = vweird.f32 %v332
  %vm490 = vweird.f32 %v483
  %vm491 = vmor %vm489, %vm490
  %v492 = vsel %vm491, %v483, %v488
  %v493 = vmul.f32 %v221, %v342
  %v494 = vmul.f32 %v222, %v352
  %v495 = vmul.f32 %v223, %v362
  %v496 = vmul.f32 %v224, %v372
  %v497 = vmul.f32 %v225, %v382
  %v498 = vmul.f32 %v226, %v392
  %v499 = vmul.f32 %v227, %v402
  %v500 = vmul.f32 %v228, %v412
  %v501 = vmul.f32 %v229, %v422
  %v502 = vmul.f32 %v230, %v432
  %v503 = vmul.f32 %v231, %v442
  %v504 = vmul.f32 %v232, %v452
  %v505 = vmul.f32 %v233, %v462
  %v506 = vmul.f32 %v234, %v472
  %v507 = vmul.f32 %v235, %v482
  %v508 = vmul.f32 %v236, %v492
  %v510 = vperm.slane %v147, 0
  %v512 = vmul.f32 %v493, %v510
  %v513 = vmul.f32 %v494, %v510
  %v514 = vmul.f32 %v495, %v510
  %v515 = vmul.f32 %v496, %v510
  %v516 = vmul.f32 %v497, %v510
  %v517 = vmul.f32 %v498, %v510
  %v518 = vmul.f32 %v499, %v510
  %v519 = vmul.f32 %v500, %v510
  %v520 = vmul.f32 %v501, %v510
  %v521 = vmul.f32 %v502, %v510
  %v522 = vmul.f32 %v503, %v510
  %v523 = vmul.f32 %v504, %v510
  %v524 = vmul.f32 %v505, %v510
  %v525 = vmul.f32 %v506, %v510
  %v526 = vmul.f32 %v507, %v510
  %v527 = vmul.f32 %v508, %v510
  %v529 = vperm.slane %v148, 0
  %v531 = vadd.f32 %v512, %v529
  %v532 = vadd.f32 %v513, %v529
  %v533 = vadd.f32 %v514, %v529
  %v534 = vadd.f32 %v515, %v529
  %v535 = vadd.f32 %v516, %v529
  %v536 = vadd.f32 %v517, %v529
  %v537 = vadd.f32 %v518, %v529
  %v538 = vadd.f32 %v519, %v529
  %v539 = vadd.f32 %v520, %v529
  %v540 = vadd.f32 %v521, %v529
  %v541 = vadd.f32 %v522, %v529
  %v542 = vadd.f32 %v523, %v529
  %v543 = vadd.f32 %v524, %v529
  %v544 = vadd.f32 %v525, %v529
  %v545 = vadd.f32 %v526, %v529
  %v546 = vadd.f32 %v527, %v529
  %547 = vst.msk [vmem:[%s5] sm:$0xff] %vm149, %v531
  %548 = vst.msk [vmem:[%s5 + $0x8] sm:$0xff] %vm149, %v532
  %549 = vst.msk [vmem:[%s5 + $0x10] sm:$0xff] %vm149, %v533
  %550 = vst.msk [vmem:[%s5 + $0x18] sm:$0xff] %vm149, %v534
  %551 = vst.msk [vmem:[%s5 + $0x20] sm:$0xff] %vm149, %v535
  %552 = vst.msk [vmem:[%s5 + $0x28] sm:$0xff] %vm149, %v536
  %553 = vst.msk [vmem:[%s5 + $0x30] sm:$0xff] %vm149, %v537
  %554 = vst.msk [vmem:[%s5 + $0x38] sm:$0xff] %vm149, %v538
  %555 = vst.msk [vmem:[%s5 + $0x40] sm:$0xff] %vm149, %v539
  %556 = vst.msk [vmem:[%s5 + $0x48] sm:$0xff] %vm149, %v540
  %557 = vst.msk [vmem:[%s5 + $0x50] sm:$0xff] %vm149, %v541
  %558 = vst.msk [vmem:[%s5 + $0x58] sm:$0xff] %vm149, %v542
  %559 = vst.msk [vmem:[%s5 + $0x60] sm:$0xff] %vm149, %v543
  %560 = vst.msk [vmem:[%s5 + $0x68] sm:$0xff] %vm149, %v544
  %561 = vst.msk [vmem:[%s5 + $0x70] sm:$0xff] %vm149, %v545
  %562 = vst.msk [vmem:[%s5 + $0x78] sm:$0xff] %vm149, %v546
  // Predicated region
  $region22: #{tpu_custom_call.1} parent=0 // pred_check
    _
  $region23: #{tpu_custom_call.1} parent=0 // pred_check_branch
    %564 = sbr.rel (0) target = $region25
  $region24: #{tpu_custom_call.1} parent=0 // pred_region
    _
  $region25: #{tpu_custom_call.1} parent=0 // pred_fallthru
    _
  // Predicated region
  $region26: #{tpu_custom_call.1} parent=0 // pred_check
    _
  $region27: #{tpu_custom_call.1} parent=0 // pred_check_branch
    %566 = sbr.rel (0) target = $region29
  $region28: #{tpu_custom_call.1} parent=0 // pred_region
    _
  $region29: #{tpu_custom_call.1} parent=0 // pred_fallthru
    _

</llo_original>
